<compile_context>
chip_gen: v7x
topology: tpu7x:2x2x1
jax: 0.10.0
libtpu: 0.0.40
codegen_flags: <defaults>
</compile_context>

<pallas_src>
import jax
import jax.numpy as jnp
from jax.experimental import pallas as pl
from jax.experimental.pallas import tpu as pltpu


def _round_up(x, m):
    return ((x + m - 1) // m) * m


def _patch_embed_kernel(a_ref, w_ref, b_ref, o_ref):
    # Single full-K MXU contraction per row tile; bf16 operands, f32
    # accumulation, bias added in f32, one cast on store.
    acc = jnp.dot(a_ref[...], w_ref[...], preferred_element_type=jnp.float32)
    o_ref[...] = (acc + b_ref[...]).astype(o_ref.dtype)


def _build_call(M, K, E, tm, out_dtype, *, single_buffer_consts):
    grid_m = pl.cdiv(M, tm)

    # Weight / bias never change across the grid: keep them resident and, when
    # supported, single-buffered so they don't cost 2x VMEM.
    const_kwargs = {"pipeline_mode": pl.Buffered(1)} if single_buffer_consts else {}
    w_spec = pl.BlockSpec((K, E), lambda i: (0, 0), **const_kwargs)
    b_spec = pl.BlockSpec((1, E), lambda i: (0, 0), **const_kwargs)

    out_itemsize = jnp.dtype(out_dtype).itemsize
    cost = pl.CostEstimate(
        flops=2 * M * K * E,
        transcendentals=0,
        bytes_accessed=(M * K * 2 + K * E * 2 + E * 4 + M * E * out_itemsize),
    )

    # VMEM working set: double-buffered patch/output tiles + resident weight.
    w_bufs = 1 if single_buffer_consts else 2
    vmem_need = (2 * tm * K * 2
                 + w_bufs * (K * E * 2 + E * 4)
                 + 2 * tm * E * out_itemsize)
    vmem_limit = max(32 * 1024 * 1024, int(1.25 * vmem_need))

    return pl.pallas_call(
        _patch_embed_kernel,
        out_shape=jax.ShapeDtypeStruct((M, E), out_dtype),
        grid_spec=pltpu.PrefetchScalarGridSpec(
            num_scalar_prefetch=0,
            grid=(grid_m,),
            in_specs=[
                pl.BlockSpec((tm, K), lambda i: (i, 0)),   # streamed row tile
                w_spec,                                    # resident weight
                b_spec,                                    # resident bias
            ],
            out_specs=pl.BlockSpec((tm, E), lambda i: (i, 0)),
        ),
        compiler_params=pltpu.CompilerParams(
            dimension_semantics=("parallel",),   # shard row tiles across TCs (v7x)
            vmem_limit_bytes=vmem_limit,
        ),
        cost_estimate=cost,
    )


def patch_embed_matmul(patches, w_flat, bias2d, *, out_dtype=jnp.float32, tm=1024):
    """patches: (M, K) bf16, w_flat: (K, E) bf16, bias2d: (1, E) f32 -> (M, E)."""
    M, K = patches.shape
    K2, E = w_flat.shape
    assert K == K2

    # Row tile selection:
    #   * >= 2 balanced 256-aligned tiles when M allows (v7x two-core megacore),
    #   * never bigger than a 128-aligned cover of M (v5e MXU row granularity),
    #   * default 1024 (v6e sweet spot; fewer per-step overheads).
    # Ragged last block handled by the cdiv grid + masked stores (no jnp.pad
    # copy of `patches`, no padded rows written back to HBM).
    tm = max(8, min(tm,
                    _round_up(pl.cdiv(M, 2), 256),
                    _round_up(M, 128)))

    try:
        return _build_call(M, K, E, tm, out_dtype,
                           single_buffer_consts=True)(patches, w_flat, bias2d)
    except Exception:
        # This JAX build rejects single-buffered constant operands; fall back
        # to the default double-buffered pipeline (one extra resident weight
        # copy of VMEM, otherwise identical). Genuine errors re-raise here.
        return _build_call(M, K, E, tm, out_dtype,
                           single_buffer_consts=False)(patches, w_flat, bias2d)


class PatchEmbedPallas:
    """JAX/Pallas equivalent of the PyTorch VideoMAE PatchEmbed module."""

    def __init__(self, img_size=16, patch_size=8, in_channels=4, embed_dims=32,
                 num_frames=4, tubelet_size=2, out_dtype=jnp.float32,
                 row_tile=1024, key=None):
        self.img_size = (img_size, img_size)
        self.patch_size = (patch_size, patch_size)
        self.tubelet_size = tubelet_size
        self.in_channels = in_channels
        self.embed_dims = embed_dims
        self.out_dtype = out_dtype      # explicit; bf16 halves writeback bytes
        self.row_tile = row_tile
        num_spatial = (img_size // patch_size) * (img_size // patch_size)
        self.num_patches = num_spatial * (num_frames // tubelet_size)

        # Deterministic parameter init (Conv3d weight: (E, C, ts, ph, pw), bias: (E,))
        if key is None:
            key = jax.random.PRNGKey(0)
        kw, kb = jax.random.split(key)
        fan_in = in_channels * tubelet_size * patch_size * patch_size
        bound = 1.0 / (fan_in ** 0.5)
        self.weight = jax.random.uniform(
            kw,
            (embed_dims, in_channels, tubelet_size, patch_size, patch_size),
            minval=-bound, maxval=bound, dtype=jnp.float32,
        )
        self.bias = jax.random.uniform(
            kb, (embed_dims,), minval=-bound, maxval=bound, dtype=jnp.float32
        )

        # GEMM-side parameters precomputed ONCE (not per forward call):
        # (E, C, ts, ph, pw) -> (E, K) -> transpose -> bf16 (K, E); bias as (1, E) f32.
        self.w_flat = jnp.asarray(self.weight.reshape(embed_dims, fan_in).T,
                                  dtype=jnp.bfloat16)
        self.bias2d = self.bias.reshape(1, embed_dims).astype(jnp.float32)

    def __call__(self, x):
        # x: (B, C, T, H, W)  -- PyTorch NCTHW layout
        B, C, T, H, W = x.shape
        assert H == self.img_size[0] and W == self.img_size[1], (
            f"Input image size ({H}*{W}) doesn't match model "
            f"({self.img_size[0]}*{self.img_size[1]})."
        )
        ts = self.tubelet_size
        ph, pw = self.patch_size
        Tt, Hp, Wp = T // ts, H // ph, W // pw
        N = Tt * Hp * Wp
        K = C * ts * ph * pw
        E = self.embed_dims

        # Glue (plain JAX): extract non-overlapping tubelets in (c, kt, kh, kw)
        # order to match the Conv3d weight flatten.  Cast to bf16 BEFORE the
        # transpose so the re-laid-out copy written to HBM is half the bytes.
        # TODO(synk): fuse this tubelet gather into the pallas_call (manual
        # strided DMA or a (b, tt, hp) grid) to remove the extra HBM round
        # trip; the required lane<->sublane relayout does not lower reliably
        # in-kernel on Mosaic today.
        xp = x.astype(jnp.bfloat16).reshape(B, C, Tt, ts, Hp, ph, Wp, pw)
        xp = jnp.transpose(xp, (0, 2, 4, 6, 1, 3, 5, 7))  # (B,Tt,Hp,Wp,C,ts,ph,pw)
        patches = xp.reshape(B * N, K)

        out = patch_embed_matmul(patches, self.w_flat, self.bias2d,
                                 out_dtype=self.out_dtype, tm=self.row_tile)
        return out.reshape(B, N, E)


def _reference(x, weight, bias, tubelet, p):
    """Pure-JAX reference via lax.conv_general_dilated (NCTHW conv)."""
    out = jax.lax.conv_general_dilated(
        x, weight,
        window_strides=(tubelet, p, p),
        padding="VALID",
        dimension_numbers=("NCDHW", "OIDHW", "NCDHW"),
    )
    out = out + bias.reshape(1, -1, 1, 1, 1)
    B, E = out.shape[0], out.shape[1]
    return out.reshape(B, E, -1).transpose(0, 2, 1)  # (B, N, E)


if __name__ == "__main__":
    key = jax.random.PRNGKey(0)
    k_x, k_params = jax.random.split(key)

    # Small shapes consistent with the module:
    B, C, T, H, W = 2, 4, 4, 16, 16
    patch, tubelet, embed = 8, 2, 32

    x = jax.random.normal(k_x, (B, C, T, H, W), dtype=jnp.float32)

    mod = PatchEmbedPallas(img_size=H, patch_size=patch, in_channels=C,
                           embed_dims=embed, num_frames=T,
                           tubelet_size=tubelet, key=k_params)

    out = jax.block_until_ready(mod(x))
    assert out.shape == (B, mod.num_patches, embed), out.shape

    # Tight check: reference conv on bf16-rounded operands (matches the MXU
    # bf16-operand / f32-accumulation math up to summation order).
    x_bf = x.astype(jnp.bfloat16).astype(jnp.float32)
    w_bf = mod.weight.astype(jnp.bfloat16).astype(jnp.float32)
    ref_bf = _reference(x_bf, w_bf, mod.bias, tubelet, patch)
    assert jnp.allclose(out, ref_bf, atol=1e-3, rtol=1e-3), (
        float(jnp.max(jnp.abs(out - ref_bf)))
    )

    # Semantic check vs. the original f32 module (loose: bf16 operand rounding).
    ref_f32 = _reference(x, mod.weight, mod.bias, tubelet, patch)
    assert jnp.allclose(out, ref_f32, atol=3e-2, rtol=3e-2), (
        float(jnp.max(jnp.abs(out - ref_f32)))
    )

    print("KERNEL_OK")
</pallas_src>

<mosaic_0001>
module attributes {stable_mosaic.version = 11 : i64} {
  func.func @_patch_embed_kernel(%arg0: i32, %arg1: memref<128x512xbf16, #tpu.memory_space<vmem>>, %arg2: memref<512x32xbf16, #tpu.memory_space<vmem>>, %arg3: memref<1x32xf32, #tpu.memory_space<vmem>>, %arg4: memref<128x32xf32, #tpu.memory_space<vmem>>) attributes {dimension_semantics = [#tpu.dimension_semantics<parallel>], iteration_bounds = array<i64: 1>, scalar_prefetch = 0 : i64, scratch_operands = 0 : i64, tpu.core_type = #tpu.core_type<tc>, window_params = [{transform_indices = @transform_0, window_bounds = array<i64: 128, 512>}, {pipeline_mode = #tpu.pipeline_mode<synchronous>, transform_indices = @transform_1, window_bounds = array<i64: 512, 32>}, {pipeline_mode = #tpu.pipeline_mode<synchronous>, transform_indices = @transform_2, window_bounds = array<i64: 1, 32>}, {transform_indices = @transform_3, window_bounds = array<i64: 128, 32>}]} {
    %c0 = arith.constant 0 : index
    %c0_0 = arith.constant 0 : index
    %0 = vector.load %arg1[%c0, %c0_0] : memref<128x512xbf16, #tpu.memory_space<vmem>>, vector<128x512xbf16>
    %c0_1 = arith.constant 0 : index
    %c0_2 = arith.constant 0 : index
    %1 = vector.load %arg2[%c0_1, %c0_2] : memref<512x32xbf16, #tpu.memory_space<vmem>>, vector<512x32xbf16>
    %cst = arith.constant dense<0.000000e+00> : vector<128x32xf32>
    %2 = tpu.matmul %0, %1, %cst {dimension_numbers = #tpu.dot_dimension_numbers<[1], [0], [0], [1], [0, 0, 1, 1], [], []>} : vector<128x512xbf16>, vector<512x32xbf16>, vector<128x32xf32> -> vector<128x32xf32>
    %c0_3 = arith.constant 0 : index
    %c0_4 = arith.constant 0 : index
    %3 = vector.load %arg3[%c0_3, %c0_4] : memref<1x32xf32, #tpu.memory_space<vmem>>, vector<1x32xf32>
    %4 = vector.broadcast %3 : vector<1x32xf32> to vector<128x32xf32>
    %5 = arith.addf %2, %4 : vector<128x32xf32>
    %c0_5 = arith.constant 0 : index
    %c0_6 = arith.constant 0 : index
    %6 = vector.load %arg4[%c0_5, %c0_6] : memref<128x32xf32, #tpu.memory_space<vmem>>, vector<128x32xf32>
    tpu.vector_store %arg4[%c0_5, %c0_6], %5 {strides = array<i32>} : memref<128x32xf32, #tpu.memory_space<vmem>>, vector<128x32xf32>,
    return
  }
  func.func @transform_0(%arg0: i32) -> (i32, i32) {
    %c0_i32 = arith.constant 0 : i32
    %c0_i32_0 = arith.constant 0 : i32
    return %arg0, %c0_i32 : i32, i32
  }
  func.func @transform_1(%arg0: i32) -> (i32, i32) {
    %c0_i32 = arith.constant 0 : i32
    %c0_i32_0 = arith.constant 0 : i32
    %c0_i32_1 = arith.constant 0 : i32
    return %c0_i32, %c0_i32_0 : i32, i32
  }
  func.func @transform_2(%arg0: i32) -> (i32, i32) {
    %c0_i32 = arith.constant 0 : i32
    %c0_i32_0 = arith.constant 0 : i32
    %c0_i32_1 = arith.constant 0 : i32
    return %c0_i32, %c0_i32_0 : i32, i32
  }
  func.func @transform_3(%arg0: i32) -> (i32, i32) {
    %c0_i32 = arith.constant 0 : i32
    %c0_i32_0 = arith.constant 0 : i32
    return %arg0, %c0_i32 : i32, i32
  }
}

module attributes {stable_mosaic.version = 11 : i64} {
  func.func @_patch_embed_kernel(%arg0: i32, %arg1: memref<128x512xbf16, #tpu.memory_space<vmem>>, %arg2: memref<512x32xbf16, #tpu.memory_space<vmem>>, %arg3: memref<1x32xf32, #tpu.memory_space<vmem>>, %arg4: memref<128x32xf32, #tpu.memory_space<vmem>>) attributes {dimension_semantics = [#tpu.dimension_semantics<parallel>], iteration_bounds = array<i64: 1>, scalar_prefetch = 0 : i64, scratch_operands = 0 : i64, tpu.core_type = #tpu.core_type<tc>, window_params = [{transform_indices = @transform_0, window_bounds = array<i64: 128, 512>}, {pipeline_mode = #tpu.pipeline_mode<synchronous>, transform_indices = @transform_1, window_bounds = array<i64: 512, 32>}, {pipeline_mode = #tpu.pipeline_mode<synchronous>, transform_indices = @transform_2, window_bounds = array<i64: 1, 32>}, {transform_indices = @transform_3, window_bounds = array<i64: 128, 32>}]} {
    %c0 = arith.constant 0 : index
    %c0_0 = arith.constant 0 : index
    %0 = vector.load %arg1[%c0, %c0_0] : memref<128x512xbf16, #tpu.memory_space<vmem>>, vector<128x512xbf16>
    %c0_1 = arith.constant 0 : index
    %c0_2 = arith.constant 0 : index
    %1 = vector.load %arg2[%c0_1, %c0_2] : memref<512x32xbf16, #tpu.memory_space<vmem>>, vector<512x32xbf16>
    %cst = arith.constant dense<0.000000e+00> : vector<128x32xf32>
    %2 = tpu.matmul %0, %1, %cst {dimension_numbers = #tpu.dot_dimension_numbers<[1], [0], [0], [1], [0, 0, 1, 1], [], []>} : vector<128x512xbf16>, vector<512x32xbf16>, vector<128x32xf32> -> vector<128x32xf32>
    %c0_3 = arith.constant 0 : index
    %c0_4 = arith.constant 0 : index
    %3 = vector.load %arg3[%c0_3, %c0_4] : memref<1x32xf32, #tpu.memory_space<vmem>>, vector<1x32xf32>
    %4 = vector.broadcast %3 : vector<1x32xf32> to vector<128x32xf32>
    %5 = arith.addf %2, %4 : vector<128x32xf32>
    %c0_5 = arith.constant 0 : index
    %c0_6 = arith.constant 0 : index
    %6 = vector.load %arg4[%c0_5, %c0_6] : memref<128x32xf32, #tpu.memory_space<vmem>>, vector<128x32xf32>
    tpu.vector_store %arg4[%c0_5, %c0_6], %5 {strides = array<i32>} : memref<128x32xf32, #tpu.memory_space<vmem>>, vector<128x32xf32>,
    return
  }
  func.func @transform_0(%arg0: i32) -> (i32, i32) {
    %c0_i32 = arith.constant 0 : i32
    %c0_i32_0 = arith.constant 0 : i32
    return %arg0, %c0_i32 : i32, i32
  }
  func.func @transform_1(%arg0: i32) -> (i32, i32) {
    %c0_i32 = arith.constant 0 : i32
    %c0_i32_0 = arith.constant 0 : i32
    %c0_i32_1 = arith.constant 0 : i32
    return %c0_i32, %c0_i32_0 : i32, i32
  }
  func.func @transform_2(%arg0: i32) -> (i32, i32) {
    %c0_i32 = arith.constant 0 : i32
    %c0_i32_0 = arith.constant 0 : i32
    %c0_i32_1 = arith.constant 0 : i32
    return %c0_i32, %c0_i32_0 : i32, i32
  }
  func.func @transform_3(%arg0: i32) -> (i32, i32) {
    %c0_i32 = arith.constant 0 : i32
    %c0_i32_0 = arith.constant 0 : i32
    return %arg0, %c0_i32 : i32, i32
  }
}

</mosaic_0001>

<llo_original>
// kernel: tpu_custom_call.1
$region0: #{tpu_custom_call.1}
  #allocation0 [shape = 'u32[]', space=smem, size = 0x4, offset = 0x4, fixed_abs, tag = 'smem constant byte address 0x4 - core index']
  #allocation1 [shape = 'u32[144,128]{1,0:T(1,128)}', space=vmem, size = 0x12000, scoped, tag = 'internal scratch']
  %s0 = inlined_call_operand.vmem [shape: bf16[16,512], index: 0, kind: input, shape index: {}]
  %s1 = inlined_call_operand.vmem [shape: bf16[512,32], index: 1, kind: input, shape index: {}]
  %s2 = inlined_call_operand.vmem [shape: f32[1,32], index: 2, kind: input, shape index: {}]
  %s3 = inlined_call_operand.hbm [shape: f32[16,32], index: 3, kind: output, shape index: {}]
  %s4 = sld [smem:[#allocation0]]
  $region22: #{tpu_custom_call.1} parent=0
    _
  %s6 = ssub.s32 1, %s4
  %s7 = scalar_select 0, %s6, %s4
  $region1: #{tpu_custom_call.1} parent=0
    #allocation2 [shape = 'u8[65536]{0}', space=vmem, size = 0x10000, scoped, tag = 'output window, operand 0, single buffered']
    #allocation3 [shape = 's32[1]{0}', space=sflag, size = 0x4, scoped, tag = 'scoped memory for tpu_custom_call.1']
    %8 = vsyncpa [#allocation3], 0
    // Predicated region
    $region2: #{tpu_custom_call.1} parent=1 // pred_check
      _
    $region3: #{tpu_custom_call.1} parent=1 // pred_check_branch
      %10 = sbr.rel (0) target = $region5
    $region4: #{tpu_custom_call.1} parent=1 // pred_region
      _
    $region5: #{tpu_custom_call.1} parent=1 // pred_fallthru
      _
    // Predicated region
    $region6: #{tpu_custom_call.1} parent=1 // pred_check
      _
    $region7: #{tpu_custom_call.1} parent=1 // pred_check_branch
      %12 = sbr.rel (0) target = $region9
    $region8: #{tpu_custom_call.1} parent=1 // pred_region
      _
    $region9: #{tpu_custom_call.1} parent=1 // pred_fallthru
      _
    // Predicated region
    $region10: #{tpu_custom_call.1} parent=1 // pred_check
      _
    $region11: #{tpu_custom_call.1} parent=1 // pred_check_branch
      %14 = sbr.rel (0) target = $region13
    $region12: #{tpu_custom_call.1} parent=1 // pred_region
      _
    $region13: #{tpu_custom_call.1} parent=1 // pred_fallthru
      _
    %v16 = vld [vmem:[%s0] sm:$0xff]
    %v17 = vld [vmem:[%s0 + $0x8] sm:$0xff]
    %v18 = vld [vmem:[%s0 + $0x10] sm:$0xff]
    %v19 = vld [vmem:[%s0 + $0x18] sm:$0xff]
    %v20 = vld [vmem:[%s0 + $0x20] sm:$0xff]
    %v21 = vld [vmem:[%s0 + $0x28] sm:$0xff]
    %v22 = vld [vmem:[%s0 + $0x30] sm:$0xff]
    %v23 = vld [vmem:[%s0 + $0x38] sm:$0xff]
    %v24 = vld [vmem:[%s0 + $0x40] sm:$0xff]
    %v25 = vld [vmem:[%s0 + $0x48] sm:$0xff]
    %v26 = vld [vmem:[%s0 + $0x50] sm:$0xff]
    %v27 = vld [vmem:[%s0 + $0x58] sm:$0xff]
    %v28 = vld [vmem:[%s0 + $0x60] sm:$0xff]
    %v29 = vld [vmem:[%s0 + $0x68] sm:$0xff]
    %v30 = vld [vmem:[%s0 + $0x70] sm:$0xff]
    %v31 = vld [vmem:[%s0 + $0x78] sm:$0xff]
    %v32 = vld [vmem:[%s0 + $0x80] sm:$0xff]
    %v33 = vld [vmem:[%s0 + $0x88] sm:$0xff]
    %v34 = vld [vmem:[%s0 + $0x90] sm:$0xff]
    %v35 = vld [vmem:[%s0 + $0x98] sm:$0xff]
    %v36 = vld [vmem:[%s0 + $0xa0] sm:$0xff]
    %v37 = vld [vmem:[%s0 + $0xa8] sm:$0xff]
    %v38 = vld [vmem:[%s0 + $0xb0] sm:$0xff]
    %v39 = vld [vmem:[%s0 + $0xb8] sm:$0xff]
    %v40 = vld [vmem:[%s0 + $0xc0] sm:$0xff]
    %v41 = vld [vmem:[%s0 + $0xc8] sm:$0xff]
    %v42 = vld [vmem:[%s0 + $0xd0] sm:$0xff]
    %v43 = vld [vmem:[%s0 + $0xd8] sm:$0xff]
    %v44 = vld [vmem:[%s0 + $0xe0] sm:$0xff]
    %v45 = vld [vmem:[%s0 + $0xe8] sm:$0xff]
    %v46 = vld [vmem:[%s0 + $0xf0] sm:$0xff]
    %v47 = vld [vmem:[%s0 + $0xf8] sm:$0xff]
    %v48 = vld [vmem:[%s1] sm:$0xf]
    %v49 = vld [vmem:[%s1 + $0x4] sm:$0xf]
    %v50 = vld [vmem:[%s1 + $0x8] sm:$0xf]
    %v51 = vld [vmem:[%s1 + $0xc] sm:$0xf]
    %v52 = vld [vmem:[%s1 + $0x10] sm:$0xf]
    %v53 = vld [vmem:[%s1 + $0x14] sm:$0xf]
    %v54 = vld [vmem:[%s1 + $0x18] sm:$0xf]
    %v55 = vld [vmem:[%s1 + $0x1c] sm:$0xf]
    %v56 = vld [vmem:[%s1 + $0x20] sm:$0xf]
    %v57 = vld [vmem:[%s1 + $0x24] sm:$0xf]
    %v58 = vld [vmem:[%s1 + $0x28] sm:$0xf]
    %v59 = vld [vmem:[%s1 + $0x2c] sm:$0xf]
    %v60 = vld [vmem:[%s1 + $0x30] sm:$0xf]
    %v61 = vld [vmem:[%s1 + $0x34] sm:$0xf]
    %v62 = vld [vmem:[%s1 + $0x38] sm:$0xf]
    %v63 = vld [vmem:[%s1 + $0x3c] sm:$0xf]
    %v64 = vld [vmem:[%s1 + $0x40] sm:$0xf]
    %v65 = vld [vmem:[%s1 + $0x44] sm:$0xf]
    %v66 = vld [vmem:[%s1 + $0x48] sm:$0xf]
    %v67 = vld [vmem:[%s1 + $0x4c] sm:$0xf]
    %v68 = vld [vmem:[%s1 + $0x50] sm:$0xf]
    %v69 = vld [vmem:[%s1 + $0x54] sm:$0xf]
    %v70 = vld [vmem:[%s1 + $0x58] sm:$0xf]
    %v71 = vld [vmem:[%s1 + $0x5c] sm:$0xf]
    %v72 = vld [vmem:[%s1 + $0x60] sm:$0xf]
    %v73 = vld [vmem:[%s1 + $0x64] sm:$0xf]
    %v74 = vld [vmem:[%s1 + $0x68] sm:$0xf]
    %v75 = vld [vmem:[%s1 + $0x6c] sm:$0xf]
    %v76 = vld [vmem:[%s1 + $0x70] sm:$0xf]
    %v77 = vld [vmem:[%s1 + $0x74] sm:$0xf]
    %v78 = vld [vmem:[%s1 + $0x78] sm:$0xf]
    %v79 = vld [vmem:[%s1 + $0x7c] sm:$0xf]
    %v80 = vld [vmem:[%s1 + $0x80] sm:$0xf]
    %v81 = vld [vmem:[%s1 + $0x84] sm:$0xf]
    %v82 = vld [vmem:[%s1 + $0x88] sm:$0xf]
    %v83 = vld [vmem:[%s1 + $0x8c] sm:$0xf]
    %v84 = vld [vmem:[%s1 + $0x90] sm:$0xf]
    %v85 = vld [vmem:[%s1 + $0x94] sm:$0xf]
    %v86 = vld [vmem:[%s1 + $0x98] sm:$0xf]
    %v87 = vld [vmem:[%s1 + $0x9c] sm:$0xf]
    %v88 = vld [vmem:[%s1 + $0xa0] sm:$0xf]
    %v89 = vld [vmem:[%s1 + $0xa4] sm:$0xf]
    %v90 = vld [vmem:[%s1 + $0xa8] sm:$0xf]
    %v91 = vld [vmem:[%s1 + $0xac] sm:$0xf]
    %v92 = vld [vmem:[%s1 + $0xb0] sm:$0xf]
    %v93 = vld [vmem:[%s1 + $0xb4] sm:$0xf]
    %v94 = vld [vmem:[%s1 + $0xb8] sm:$0xf]
    %v95 = vld [vmem:[%s1 + $0xbc] sm:$0xf]
    %v96 = vld [vmem:[%s1 + $0xc0] sm:$0xf]
    %v97 = vld [vmem:[%s1 + $0xc4] sm:$0xf]
    %v98 = vld [vmem:[%s1 + $0xc8] sm:$0xf]
    %v99 = vld [vmem:[%s1 + $0xcc] sm:$0xf]
    %v100 = vld [vmem:[%s1 + $0xd0] sm:$0xf]
    %v101 = vld [vmem:[%s1 + $0xd4] sm:$0xf]
    %v102 = vld [vmem:[%s1 + $0xd8] sm:$0xf]
    %v103 = vld [vmem:[%s1 + $0xdc] sm:$0xf]
    %v104 = vld [vmem:[%s1 + $0xe0] sm:$0xf]
    %v105 = vld [vmem:[%s1 + $0xe4] sm:$0xf]
    %v106 = vld [vmem:[%s1 + $0xe8] sm:$0xf]
    %v107 = vld [vmem:[%s1 + $0xec] sm:$0xf]
    %v108 = vld [vmem:[%s1 + $0xf0] sm:$0xf]
    %v109 = vld [vmem:[%s1 + $0xf4] sm:$0xf]
    %v110 = vld [vmem:[%s1 + $0xf8] sm:$0xf]
    %v111 = vld [vmem:[%s1 + $0xfc] sm:$0xf]
    %v112 = vld [vmem:[%s2] sm:$0x1]
    %v114 = vlaneseq
    %v115 = vshrl.u32 %v114, 7
    %v116 = vsub.s32 0, %v115
    %v117 = vrot.slane %v112, %v116
    %v151 = vunpack.c.l.b16 %v16
    %v152 = vunpack.c.h.b16 %v16
    %v153 = vunpack.c.l.b16 %v17
    %v154 = vunpack.c.h.b16 %v17
    %v155 = vunpack.c.l.b16 %v18
    %v156 = vunpack.c.h.b16 %v18
    %v157 = vunpack.c.l.b16 %v19
    %v158 = vunpack.c.h.b16 %v19
    %v159 = vunpack.c.l.b16 %v20
    %v160 = vunpack.c.h.b16 %v20
    %v161 = vunpack.c.l.b16 %v21
    %v162 = vunpack.c.h.b16 %v21
    %v163 = vunpack.c.l.b16 %v22
    %v164 = vunpack.c.h.b16 %v22
    %v165 = vunpack.c.l.b16 %v23
    %v166 = vunpack.c.h.b16 %v23
    %v167 = vunpack.c.l.b16 %v24
    %v168 = vunpack.c.h.b16 %v24
    %v169 = vunpack.c.l.b16 %v25
    %v170 = vunpack.c.h.b16 %v25
    %v171 = vunpack.c.l.b16 %v26
    %v172 = vunpack.c.h.b16 %v26
    %v173 = vunpack.c.l.b16 %v27
    %v174 = vunpack.c.h.b16 %v27
    %v175 = vunpack.c.l.b16 %v28
    %v176 = vunpack.c.h.b16 %v28
    %v177 = vunpack.c.l.b16 %v29
    %v178 = vunpack.c.h.b16 %v29
    %v179 = vunpack.c.l.b16 %v30
    %v180 = vunpack.c.h.b16 %v30
    %v181 = vunpack.c.l.b16 %v31
    %v182 = vunpack.c.h.b16 %v31
    %v183 = vunpack.c.l.b16 %v32
    %v184 = vunpack.c.h.b16 %v32
    %v185 = vunpack.c.l.b16 %v33
    %v186 = vunpack.c.h.b16 %v33
    %v187 = vunpack.c.l.b16 %v34
    %v188 = vunpack.c.h.b16 %v34
    %v189 = vunpack.c.l.b16 %v35
    %v190 = vunpack.c.h.b16 %v35
    %v191 = vunpack.c.l.b16 %v36
    %v192 = vunpack.c.h.b16 %v36
    %v193 = vunpack.c.l.b16 %v37
    %v194 = vunpack.c.h.b16 %v37
    %v195 = vunpack.c.l.b16 %v38
    %v196 = vunpack.c.h.b16 %v38
    %v197 = vunpack.c.l.b16 %v39
    %v198 = vunpack.c.h.b16 %v39
    %v199 = vunpack.c.l.b16 %v40
    %v200 = vunpack.c.h.b16 %v40
    %v201 = vunpack.c.l.b16 %v41
    %v202 = vunpack.c.h.b16 %v41
    %v203 = vunpack.c.l.b16 %v42
    %v204 = vunpack.c.h.b16 %v42
    %v205 = vunpack.c.l.b16 %v43
    %v206 = vunpack.c.h.b16 %v43
    %v207 = vunpack.c.l.b16 %v44
    %v208 = vunpack.c.h.b16 %v44
    %v209 = vunpack.c.l.b16 %v45
    %v210 = vunpack.c.h.b16 %v45
    %v211 = vunpack.c.l.b16 %v46
    %v212 = vunpack.c.h.b16 %v46
    %v213 = vunpack.c.l.b16 %v47
    %v214 = vunpack.c.h.b16 %v47
    %v215 = vpack.c.b16 %v155, %v151
    %v216 = vpack.c.b16 %v156, %v152
    %v217 = vpack.c.b16 %v157, %v153
    %v218 = vpack.c.b16 %v158, %v154
    %v219 = vpack.c.b16 %v163, %v159
    %v220 = vpack.c.b16 %v164, %v160
    %v221 = vpack.c.b16 %v165, %v161
    %v222 = vpack.c.b16 %v166, %v162
    %v223 = vpack.c.b16 %v171, %v167
    %v224 = vpack.c.b16 %v172, %v168
    %v225 = vpack.c.b16 %v173, %v169
    %v226 = vpack.c.b16 %v174, %v170
    %v227 = vpack.c.b16 %v179, %v175
    %v228 = vpack.c.b16 %v180, %v176
    %v229 = vpack.c.b16 %v181, %v177
    %v230 = vpack.c.b16 %v182, %v178
    %v231 = vpack.c.b16 %v187, %v183
    %v232 = vpack.c.b16 %v188, %v184
    %v233 = vpack.c.b16 %v189, %v185
    %v234 = vpack.c.b16 %v190, %v186
    %v235 = vpack.c.b16 %v195, %v191
    %v236 = vpack.c.b16 %v196, %v192
    %v237 = vpack.c.b16 %v197, %v193
    %v238 = vpack.c.b16 %v198, %v194
    %v239 = vpack.c.b16 %v203, %v199
    %v240 = vpack.c.b16 %v204, %v200
    %v241 = vpack.c.b16 %v205, %v201
    %v242 = vpack.c.b16 %v206, %v202
    %v243 = vpack.c.b16 %v211, %v207
    %v244 = vpack.c.b16 %v212, %v208
    %v245 = vpack.c.b16 %v213, %v209
    %v246 = vpack.c.b16 %v214, %v210
    %v343 = vunpack.c.l.b16 %v48
    %v344 = vunpack.c.l.b16 %v49
    %v345 = vunpack.c.l.b16 %v50
    %v346 = vunpack.c.l.b16 %v51
    %v347 = vunpack.c.l.b16 %v52
    %v348 = vunpack.c.l.b16 %v53
    %v349 = vunpack.c.l.b16 %v54
    %v350 = vunpack.c.l.b16 %v55
    %v351 = vunpack.c.l.b16 %v56
    %v352 = vunpack.c.l.b16 %v57
    %v353 = vunpack.c.l.b16 %v58
    %v354 = vunpack.c.l.b16 %v59
    %v355 = vunpack.c.l.b16 %v60
    %v356 = vunpack.c.l.b16 %v61
    %v357 = vunpack.c.l.b16 %v62
    %v358 = vunpack.c.l.b16 %v63
    %v359 = vunpack.c.l.b16 %v64
    %v360 = vunpack.c.l.b16 %v65
    %v361 = vunpack.c.l.b16 %v66
    %v362 = vunpack.c.l.b16 %v67
    %v363 = vunpack.c.l.b16 %v68
    %v364 = vunpack.c.l.b16 %v69
    %v365 = vunpack.c.l.b16 %v70
    %v366 = vunpack.c.l.b16 %v71
    %v367 = vunpack.c.l.b16 %v72
    %v368 = vunpack.c.l.b16 %v73
    %v369 = vunpack.c.l.b16 %v74
    %v370 = vunpack.c.l.b16 %v75
    %v371 = vunpack.c.l.b16 %v76
    %v372 = vunpack.c.l.b16 %v77
    %v373 = vunpack.c.l.b16 %v78
    %v374 = vunpack.c.l.b16 %v79
    %v375 = vunpack.c.l.b16 %v80
    %v376 = vunpack.c.l.b16 %v81
    %v377 = vunpack.c.l.b16 %v82
    %v378 = vunpack.c.l.b16 %v83
    %v379 = vunpack.c.l.b16 %v84
    %v380 = vunpack.c.l.b16 %v85
    %v381 = vunpack.c.l.b16 %v86
    %v382 = vunpack.c.l.b16 %v87
    %v383 = vunpack.c.l.b16 %v88
    %v384 = vunpack.c.l.b16 %v89
    %v385 = vunpack.c.l.b16 %v90
    %v386 = vunpack.c.l.b16 %v91
    %v387 = vunpack.c.l.b16 %v92
    %v388 = vunpack.c.l.b16 %v93
    %v389 = vunpack.c.l.b16 %v94
    %v390 = vunpack.c.l.b16 %v95
    %v391 = vunpack.c.l.b16 %v96
    %v392 = vunpack.c.l.b16 %v97
    %v393 = vunpack.c.l.b16 %v98
    %v394 = vunpack.c.l.b16 %v99
    %v395 = vunpack.c.l.b16 %v100
    %v396 = vunpack.c.l.b16 %v101
    %v397 = vunpack.c.l.b16 %v102
    %v398 = vunpack.c.l.b16 %v103
    %v399 = vunpack.c.l.b16 %v104
    %v400 = vunpack.c.l.b16 %v105
    %v401 = vunpack.c.l.b16 %v106
    %v402 = vunpack.c.l.b16 %v107
    %v403 = vunpack.c.l.b16 %v108
    %v404 = vunpack.c.l.b16 %v109
    %v405 = vunpack.c.l.b16 %v110
    %v406 = vunpack.c.l.b16 %v111
    %v407 = vpack.c.b16 %v344, %v343
    %v408 = vpack.c.b16 %v346, %v345
    %v409 = vpack.c.b16 %v348, %v347
    %v410 = vpack.c.b16 %v350, %v349
    %v411 = vpack.c.b16 %v352, %v351
    %v412 = vpack.c.b16 %v354, %v353
    %v413 = vpack.c.b16 %v356, %v355
    %v414 = vpack.c.b16 %v358, %v357
    %v415 = vpack.c.b16 %v360, %v359
    %v416 = vpack.c.b16 %v362, %v361
    %v417 = vpack.c.b16 %v364, %v363
    %v418 = vpack.c.b16 %v366, %v365
    %v419 = vpack.c.b16 %v368, %v367
    %v420 = vpack.c.b16 %v370, %v369
    %v421 = vpack.c.b16 %v372, %v371
    %v422 = vpack.c.b16 %v374, %v373
    %v423 = vpack.c.b16 %v376, %v375
    %v424 = vpack.c.b16 %v378, %v377
    %v425 = vpack.c.b16 %v380, %v379
    %v426 = vpack.c.b16 %v382, %v381
    %v427 = vpack.c.b16 %v384, %v383
    %v428 = vpack.c.b16 %v386, %v385
    %v429 = vpack.c.b16 %v388, %v387
    %v430 = vpack.c.b16 %v390, %v389
    %v431 = vpack.c.b16 %v392, %v391
    %v432 = vpack.c.b16 %v394, %v393
    %v433 = vpack.c.b16 %v396, %v395
    %v434 = vpack.c.b16 %v398, %v397
    %v435 = vpack.c.b16 %v400, %v399
    %v436 = vpack.c.b16 %v402, %v401
    %v437 = vpack.c.b16 %v404, %v403
    %v438 = vpack.c.b16 %v406, %v405
    %471 = vmatprep.subr.bf16.mxu0 0
    %472 = vmatpush1.bf16.msra.mxu0 %v407
    %473 = vmatprep.subr.bf16.mxu0 0
    %474 = vmatpush1.bf16.msra.mxu0 %v408
    %475 = vmatprep.subr.bf16.mxu0 0
    %476 = vmatpush1.bf16.msra.mxu0 %v409
    %477 = vmatprep.subr.bf16.mxu0 0
    %478 = vmatpush1.bf16.msra.mxu0 %v410
    %479 = vmatprep.subr.bf16.mxu0 0
    %480 = vmatpush1.bf16.msra.mxu0 %v411
    %481 = vmatprep.subr.bf16.mxu0 0
    %482 = vmatpush1.bf16.msra.mxu0 %v412
    %483 = vmatprep.subr.bf16.mxu0 0
    %484 = vmatpush1.bf16.msra.mxu0 %v413
    %485 = vmatprep.subr.bf16.mxu0 0
    %486 = vmatpush1.bf16.msra.mxu0 %v414
    %487 = vmatprep.subr.bf16.mxu0 0
    %488 = vmatpush1.bf16.msra.mxu0 %v415
    %489 = vmatprep.subr.bf16.mxu0 0
    %490 = vmatpush1.bf16.msra.mxu0 %v416
    %491 = vmatprep.subr.bf16.mxu0 0
    %492 = vmatpush1.bf16.msra.mxu0 %v417
    %493 = vmatprep.subr.bf16.mxu0 0
    %494 = vmatpush1.bf16.msra.mxu0 %v418
    %495 = vmatprep.subr.bf16.mxu0 0
    %496 = vmatpush1.bf16.msra.mxu0 %v419
    %497 = vmatprep.subr.bf16.mxu0 0
    %498 = vmatpush1.bf16.msra.mxu0 %v420
    %499 = vmatprep.subr.bf16.mxu0 0
    %500 = vmatpush1.bf16.msra.mxu0 %v421
    %501 = vmatprep.subr.bf16.mxu0 0
    %502 = vmatpush1.bf16.msra.mxu0 %v422
    %503 = vmatprep.mubr.bf16.mxu0 %v216
    %504 = vmatmul.mubr.bf16.gmra.mrb[0].mxu0 %v215
    %v505 = vpop.f32.mrb[0].mxu0
    %v506 = vadd.f32 %v117, %v505
    %v507 = vpop.f32.mrb[0].mxu0
    %v508 = vpop.f32.mrb[0].mxu0
    %v509 = vadd.f32 %v117, %v508
    %v510 = vpop.f32.mrb[0].mxu0
    %511 = vmatprep.mubr.bf16.mxu0 %v220
    %512 = vmatmul.mubr.bf16.gmra.mrb[0].mxu0 %v219
    %v513 = vpop.f32.mrb[0].mxu0
    %v514 = vadd.f32 %v117, %v513
    %v515 = vpop.f32.mrb[0].mxu0
    %v516 = vpop.f32.mrb[0].mxu0
    %v517 = vadd.f32 %v117, %v516
    %v518 = vpop.f32.mrb[0].mxu0
    %519 = vmatprep.mubr.bf16.mxu0 %v224
    %520 = vmatmul.mubr.bf16.gmra.mrb[0].mxu0 %v223
    %v521 = vpop.f32.mrb[0].mxu0
    %v522 = vadd.f32 %v117, %v521
    %v523 = vpop.f32.mrb[0].mxu0
    %v524 = vpop.f32.mrb[0].mxu0
    %v525 = vadd.f32 %v117, %v524
    %v526 = vpop.f32.mrb[0].mxu0
    %527 = vmatprep.mubr.bf16.mxu0 %v228
    %528 = vmatmul.mubr.bf16.gmra.mrb[0].mxu0 %v227
    %v529 = vpop.f32.mrb[0].mxu0
    %v530 = vadd.f32 %v117, %v529
    %v531 = vpop.f32.mrb[0].mxu0
    %v532 = vpop.f32.mrb[0].mxu0
    %v533 = vadd.f32 %v117, %v532
    %v534 = vpop.f32.mrb[0].mxu0
    %535 = vmatprep.mubr.bf16.mxu0 %v232
    %536 = vmatmul.mubr.bf16.gmra.mrb[0].mxu0 %v231
    %v537 = vpop.f32.mrb[0].mxu0
    %v538 = vadd.f32 %v117, %v537
    %v539 = vpop.f32.mrb[0].mxu0
    %v540 = vpop.f32.mrb[0].mxu0
    %v541 = vadd.f32 %v117, %v540
    %v542 = vpop.f32.mrb[0].mxu0
    %543 = vmatprep.mubr.bf16.mxu0 %v236
    %544 = vmatmul.mubr.bf16.gmra.mrb[0].mxu0 %v235
    %v545 = vpop.f32.mrb[0].mxu0
    %v546 = vadd.f32 %v117, %v545
    %v547 = vpop.f32.mrb[0].mxu0
    %v548 = vpop.f32.mrb[0].mxu0
    %v549 = vadd.f32 %v117, %v548
    %v550 = vpop.f32.mrb[0].mxu0
    %551 = vmatprep.mubr.bf16.mxu0 %v240
    %552 = vmatmul.mubr.bf16.gmra.mrb[0].mxu0 %v239
    %v553 = vpop.f32.mrb[0].mxu0
    %v554 = vadd.f32 %v117, %v553
    %v555 = vpop.f32.mrb[0].mxu0
    %v556 = vpop.f32.mrb[0].mxu0
    %v557 = vadd.f32 %v117, %v556
    %v558 = vpop.f32.mrb[0].mxu0
    %559 = vmatprep.mubr.bf16.mxu0 %v244
    %560 = vmatmul.mubr.bf16.gmra.mrb[0].mxu0 %v243
    %v561 = vpop.f32.mrb[0].mxu0
    %v562 = vadd.f32 %v117, %v561
    %v563 = vpop.f32.mrb[0].mxu0
    %v564 = vpop.f32.mrb[0].mxu0
    %v565 = vadd.f32 %v117, %v564
    %v566 = vpop.f32.mrb[0].mxu0
    %567 = vdwg.mxu0
    %568 = vmatprep.subr.bf16.mxu0 0
    %569 = vmatpush1.bf16.msra.mxu0 %v423
    %570 = vmatprep.subr.bf16.mxu0 0
    %571 = vmatpush1.bf16.msra.mxu0 %v424
    %572 = vmatprep.subr.bf16.mxu0 0
    %573 = vmatpush1.bf16.msra.mxu0 %v425
    %574 = vmatprep.subr.bf16.mxu0 0
    %575 = vmatpush1.bf16.msra.mxu0 %v426
    %576 = vmatprep.subr.bf16.mxu0 0
    %577 = vmatpush1.bf16.msra.mxu0 %v427
    %578 = vmatprep.subr.bf16.mxu0 0
    %579 = vmatpush1.bf16.msra.mxu0 %v428
    %580 = vmatprep.subr.bf16.mxu0 0
    %581 = vmatpush1.bf16.msra.mxu0 %v429
    %582 = vmatprep.subr.bf16.mxu0 0
    %583 = vmatpush1.bf16.msra.mxu0 %v430
    %584 = vmatprep.subr.bf16.mxu0 0
    %585 = vmatpush1.bf16.msra.mxu0 %v431
    %586 = vmatprep.subr.bf16.mxu0 0
    %587 = vmatpush1.bf16.msra.mxu0 %v432
    %588 = vmatprep.subr.bf16.mxu0 0
    %589 = vmatpush1.bf16.msra.mxu0 %v433
    %590 = vmatprep.subr.bf16.mxu0 0
    %591 = vmatpush1.bf16.msra.mxu0 %v434
    %592 = vmatprep.subr.bf16.mxu0 0
    %593 = vmatpush1.bf16.msra.mxu0 %v435
    %594 = vmatprep.subr.bf16.mxu0 0
    %595 = vmatpush1.bf16.msra.mxu0 %v436
    %596 = vmatprep.subr.bf16.mxu0 0
    %597 = vmatpush1.bf16.msra.mxu0 %v437
    %598 = vmatprep.subr.bf16.mxu0 0
    %599 = vmatpush1.bf16.msra.mxu0 %v438
    %600 = vmatprep.mubr.bf16.mxu0 %v218
    %601 = vmatmul.mubr.bf16.gmra.mrb[0].mxu0 %v217
    %v602 = vpop.f32.mrb[0].mxu0
    %v603 = vadd.f32 %v506, %v602
    %v604 = vpop.f32.mrb[0].mxu0
    %v605 = vpop.f32.mrb[0].mxu0
    %v606 = vadd.f32 %v509, %v605
    %v607 = vpop.f32.mrb[0].mxu0
    %608 = vmatprep.mubr.bf16.mxu0 %v222
    %609 = vmatmul.mubr.bf16.gmra.mrb[0].mxu0 %v221
    %v610 = vpop.f32.mrb[0].mxu0
    %v611 = vadd.f32 %v514, %v610
    %v612 = vpop.f32.mrb[0].mxu0
    %v613 = vpop.f32.mrb[0].mxu0
    %v614 = vadd.f32 %v517, %v613
    %v615 = vpop.f32.mrb[0].mxu0
    %616 = vmatprep.mubr.bf16.mxu0 %v226
    %617 = vmatmul.mubr.bf16.gmra.mrb[0].mxu0 %v225
    %v618 = vpop.f32.mrb[0].mxu0
    %v619 = vadd.f32 %v522, %v618
    %v620 = vpop.f32.mrb[0].mxu0
    %v621 = vpop.f32.mrb[0].mxu0
    %v622 = vadd.f32 %v525, %v621
    %v623 = vpop.f32.mrb[0].mxu0
    %624 = vmatprep.mubr.bf16.mxu0 %v230
    %625 = vmatmul.mubr.bf16.gmra.mrb[0].mxu0 %v229
    %v626 = vpop.f32.mrb[0].mxu0
    %v627 = vadd.f32 %v530, %v626
    %v628 = vpop.f32.mrb[0].mxu0
    %v629 = vpop.f32.mrb[0].mxu0
    %v630 = vadd.f32 %v533, %v629
    %v631 = vpop.f32.mrb[0].mxu0
    %632 = vmatprep.mubr.bf16.mxu0 %v234
    %633 = vmatmul.mubr.bf16.gmra.mrb[0].mxu0 %v233
    %v634 = vpop.f32.mrb[0].mxu0
    %v635 = vadd.f32 %v538, %v634
    %v636 = vpop.f32.mrb[0].mxu0
    %v637 = vpop.f32.mrb[0].mxu0
    %v638 = vadd.f32 %v541, %v637
    %v639 = vpop.f32.mrb[0].mxu0
    %640 = vmatprep.mubr.bf16.mxu0 %v238
    %641 = vmatmul.mubr.bf16.gmra.mrb[0].mxu0 %v237
    %v642 = vpop.f32.mrb[0].mxu0
    %v643 = vadd.f32 %v546, %v642
    %v644 = vpop.f32.mrb[0].mxu0
    %v645 = vpop.f32.mrb[0].mxu0
    %v646 = vadd.f32 %v549, %v645
    %v647 = vpop.f32.mrb[0].mxu0
    %648 = vmatprep.mubr.bf16.mxu0 %v242
    %649 = vmatmul.mubr.bf16.gmra.mrb[0].mxu0 %v241
    %v650 = vpop.f32.mrb[0].mxu0
    %v651 = vadd.f32 %v554, %v650
    %v652 = vpop.f32.mrb[0].mxu0
    %v653 = vpop.f32.mrb[0].mxu0
    %v654 = vadd.f32 %v557, %v653
    %v655 = vpop.f32.mrb[0].mxu0
    %656 = vmatprep.mubr.bf16.mxu0 %v246
    %657 = vmatmul.mubr.bf16.gmra.mrb[0].mxu0 %v245
    %v658 = vpop.f32.mrb[0].mxu0
    %v659 = vadd.f32 %v562, %v658
    %v660 = vpop.f32.mrb[0].mxu0
    %v661 = vpop.f32.mrb[0].mxu0
    %v662 = vadd.f32 %v565, %v661
    %v663 = vpop.f32.mrb[0].mxu0
    %664 = vdwg.mxu0
    %vm665 = vcmask 261120
    %666 = vst.msk [vmem:[#allocation2] sm:$0xff] %vm665, %v603
    %667 = vst.msk [vmem:[#allocation2 + $0x8] sm:$0xff] %vm665, %v606
    %668 = vst.msk [vmem:[#allocation2 + $0x10] sm:$0xff] %vm665, %v611
    %669 = vst.msk [vmem:[#allocation2 + $0x18] sm:$0xff] %vm665, %v614
    %670 = vst.msk [vmem:[#allocation2 + $0x20] sm:$0xff] %vm665, %v619
    %671 = vst.msk [vmem:[#allocation2 + $0x28] sm:$0xff] %vm665, %v622
    %672 = vst.msk [vmem:[#allocation2 + $0x30] sm:$0xff] %vm665, %v627
    %673 = vst.msk [vmem:[#allocation2 + $0x38] sm:$0xff] %vm665, %v630
    %674 = vst.msk [vmem:[#allocation2 + $0x40] sm:$0xff] %vm665, %v635
    %675 = vst.msk [vmem:[#allocation2 + $0x48] sm:$0xff] %vm665, %v638
    %676 = vst.msk [vmem:[#allocation2 + $0x50] sm:$0xff] %vm665, %v643
    %677 = vst.msk [vmem:[#allocation2 + $0x58] sm:$0xff] %vm665, %v646
    %678 = vst.msk [vmem:[#allocation2 + $0x60] sm:$0xff] %vm665, %v651
    %679 = vst.msk [vmem:[#allocation2 + $0x68] sm:$0xff] %vm665, %v654
    %680 = vst.msk [vmem:[#allocation2 + $0x70] sm:$0xff] %vm665, %v659
    %681 = vst.msk [vmem:[#allocation2 + $0x78] sm:$0xff] %vm665, %v662
    // Predicated region
    $region14: #{tpu_custom_call.1} parent=1 // pred_check
      _
    $region15: #{tpu_custom_call.1} parent=1 // pred_check_branch
      %683 = sbr.rel (0) target = $region17
    $region16: #{tpu_custom_call.1} parent=1 // pred_region
      %s685 = ssub.s32 2048, 256
      %686 = vsyncadd [#allocation3], %s685
      %s687 = sshll.u32 [#allocation2], 4
      %s688 = int_to_ptr.vmem [resolvable:$true] %s687
      %693 = dma.vmem_to_hbm [thread:$0]  %s688, 256, %s3, [#allocation3], 128, 128, 8
    $region17: #{tpu_custom_call.1} parent=1 // pred_fallthru
      _
    // Predicated region
    $region18: #{tpu_custom_call.1} parent=1 // pred_check
      _
    $region19: #{tpu_custom_call.1} parent=1 // pred_check_branch
      %695 = sbr.rel (0) target = $region21
    $region20: #{tpu_custom_call.1} parent=1 // pred_region
      %696 = dma.done [#allocation3], 2048
    $region21: #{tpu_custom_call.1} parent=1 // pred_fallthru
      _
    %697 = vsyncpa [#allocation3], 1

// kernel: tpu_custom_call.1
$region0: #{tpu_custom_call.1}
  #allocation0 [shape = 'u32[]', space=smem, size = 0x4, offset = 0x4, fixed_abs, tag = 'smem constant byte address 0x4 - core index']
  #allocation1 [shape = 'u32[144,128]{1,0:T(1,128)}', space=vmem, size = 0x12000, scoped, tag = 'internal scratch']
  %s0 = inlined_call_operand.vmem [shape: bf16[16,512], index: 0, kind: input, shape index: {}]
  %s1 = inlined_call_operand.vmem [shape: bf16[512,32], index: 1, kind: input, shape index: {}]
  %s2 = inlined_call_operand.vmem [shape: f32[1,32], index: 2, kind: input, shape index: {}]
  %s3 = inlined_call_operand.hbm [shape: f32[16,32], index: 3, kind: output, shape index: {}]
  %s4 = sld [smem:[#allocation0]]
  $region22: #{tpu_custom_call.1} parent=0
    _
  %s6 = ssub.s32 1, %s4
  %s7 = scalar_select 0, %s6, %s4
  $region1: #{tpu_custom_call.1} parent=0
    #allocation2 [shape = 'u8[65536]{0}', space=vmem, size = 0x10000, scoped, tag = 'output window, operand 0, single buffered']
    #allocation3 [shape = 's32[1]{0}', space=sflag, size = 0x4, scoped, tag = 'scoped memory for tpu_custom_call.1']
    %8 = vsyncpa [#allocation3], 0
    // Predicated region
    $region2: #{tpu_custom_call.1} parent=1 // pred_check
      _
    $region3: #{tpu_custom_call.1} parent=1 // pred_check_branch
      %10 = sbr.rel (0) target = $region5
    $region4: #{tpu_custom_call.1} parent=1 // pred_region
      _
    $region5: #{tpu_custom_call.1} parent=1 // pred_fallthru
      _
    // Predicated region
    $region6: #{tpu_custom_call.1} parent=1 // pred_check
      _
    $region7: #{tpu_custom_call.1} parent=1 // pred_check_branch
      %12 = sbr.rel (0) target = $region9
    $region8: #{tpu_custom_call.1} parent=1 // pred_region
      _
    $region9: #{tpu_custom_call.1} parent=1 // pred_fallthru
      _
    // Predicated region
    $region10: #{tpu_custom_call.1} parent=1 // pred_check
      _
    $region11: #{tpu_custom_call.1} parent=1 // pred_check_branch
      %14 = sbr.rel (0) target = $region13
    $region12: #{tpu_custom_call.1} parent=1 // pred_region
      _
    $region13: #{tpu_custom_call.1} parent=1 // pred_fallthru
      _
    %v16 = vld [vmem:[%s0] sm:$0xff]
    %v17 = vld [vmem:[%s0 + $0x8] sm:$0xff]
    %v18 = vld [vmem:[%s0 + $0x10] sm:$0xff]
    %v19 = vld [vmem:[%s0 + $0x18] sm:$0xff]
    %v20 = vld [vmem:[%s0 + $0x20] sm:$0xff]
    %v21 = vld [vmem:[%s0 + $0x28] sm:$0xff]
    %v22 = vld [vmem:[%s0 + $0x30] sm:$0xff]
    %v23 = vld [vmem:[%s0 + $0x38] sm:$0xff]
    %v24 = vld [vmem:[%s0 + $0x40] sm:$0xff]
    %v25 = vld [vmem:[%s0 + $0x48] sm:$0xff]
    %v26 = vld [vmem:[%s0 + $0x50] sm:$0xff]
    %v27 = vld [vmem:[%s0 + $0x58] sm:$0xff]
    %v28 = vld [vmem:[%s0 + $0x60] sm:$0xff]
    %v29 = vld [vmem:[%s0 + $0x68] sm:$0xff]
    %v30 = vld [vmem:[%s0 + $0x70] sm:$0xff]
    %v31 = vld [vmem:[%s0 + $0x78] sm:$0xff]
    %v32 = vld [vmem:[%s0 + $0x80] sm:$0xff]
    %v33 = vld [vmem:[%s0 + $0x88] sm:$0xff]
    %v34 = vld [vmem:[%s0 + $0x90] sm:$0xff]
    %v35 = vld [vmem:[%s0 + $0x98] sm:$0xff]
    %v36 = vld [vmem:[%s0 + $0xa0] sm:$0xff]
    %v37 = vld [vmem:[%s0 + $0xa8] sm:$0xff]
    %v38 = vld [vmem:[%s0 + $0xb0] sm:$0xff]
    %v39 = vld [vmem:[%s0 + $0xb8] sm:$0xff]
    %v40 = vld [vmem:[%s0 + $0xc0] sm:$0xff]
    %v41 = vld [vmem:[%s0 + $0xc8] sm:$0xff]
    %v42 = vld [vmem:[%s0 + $0xd0] sm:$0xff]
    %v43 = vld [vmem:[%s0 + $0xd8] sm:$0xff]
    %v44 = vld [vmem:[%s0 + $0xe0] sm:$0xff]
    %v45 = vld [vmem:[%s0 + $0xe8] sm:$0xff]
    %v46 = vld [vmem:[%s0 + $0xf0] sm:$0xff]
    %v47 = vld [vmem:[%s0 + $0xf8] sm:$0xff]
    %v48 = vld [vmem:[%s1] sm:$0xf]
    %v49 = vld [vmem:[%s1 + $0x4] sm:$0xf]
    %v50 = vld [vmem:[%s1 + $0x8] sm:$0xf]
    %v51 = vld [vmem:[%s1 + $0xc] sm:$0xf]
    %v52 = vld [vmem:[%s1 + $0x10] sm:$0xf]
    %v53 = vld [vmem:[%s1 + $0x14] sm:$0xf]
    %v54 = vld [vmem:[%s1 + $0x18] sm:$0xf]
    %v55 = vld [vmem:[%s1 + $0x1c] sm:$0xf]
    %v56 = vld [vmem:[%s1 + $0x20] sm:$0xf]
    %v57 = vld [vmem:[%s1 + $0x24] sm:$0xf]
    %v58 = vld [vmem:[%s1 + $0x28] sm:$0xf]
    %v59 = vld [vmem:[%s1 + $0x2c] sm:$0xf]
    %v60 = vld [vmem:[%s1 + $0x30] sm:$0xf]
    %v61 = vld [vmem:[%s1 + $0x34] sm:$0xf]
    %v62 = vld [vmem:[%s1 + $0x38] sm:$0xf]
    %v63 = vld [vmem:[%s1 + $0x3c] sm:$0xf]
    %v64 = vld [vmem:[%s1 + $0x40] sm:$0xf]
    %v65 = vld [vmem:[%s1 + $0x44] sm:$0xf]
    %v66 = vld [vmem:[%s1 + $0x48] sm:$0xf]
    %v67 = vld [vmem:[%s1 + $0x4c] sm:$0xf]
    %v68 = vld [vmem:[%s1 + $0x50] sm:$0xf]
    %v69 = vld [vmem:[%s1 + $0x54] sm:$0xf]
    %v70 = vld [vmem:[%s1 + $0x58] sm:$0xf]
    %v71 = vld [vmem:[%s1 + $0x5c] sm:$0xf]
    %v72 = vld [vmem:[%s1 + $0x60] sm:$0xf]
    %v73 = vld [vmem:[%s1 + $0x64] sm:$0xf]
    %v74 = vld [vmem:[%s1 + $0x68] sm:$0xf]
    %v75 = vld [vmem:[%s1 + $0x6c] sm:$0xf]
    %v76 = vld [vmem:[%s1 + $0x70] sm:$0xf]
    %v77 = vld [vmem:[%s1 + $0x74] sm:$0xf]
    %v78 = vld [vmem:[%s1 + $0x78] sm:$0xf]
    %v79 = vld [vmem:[%s1 + $0x7c] sm:$0xf]
    %v80 = vld [vmem:[%s1 + $0x80] sm:$0xf]
    %v81 = vld [vmem:[%s1 + $0x84] sm:$0xf]
    %v82 = vld [vmem:[%s1 + $0x88] sm:$0xf]
    %v83 = vld [vmem:[%s1 + $0x8c] sm:$0xf]
    %v84 = vld [vmem:[%s1 + $0x90] sm:$0xf]
    %v85 = vld [vmem:[%s1 + $0x94] sm:$0xf]
    %v86 = vld [vmem:[%s1 + $0x98] sm:$0xf]
    %v87 = vld [vmem:[%s1 + $0x9c] sm:$0xf]
    %v88 = vld [vmem:[%s1 + $0xa0] sm:$0xf]
    %v89 = vld [vmem:[%s1 + $0xa4] sm:$0xf]
    %v90 = vld [vmem:[%s1 + $0xa8] sm:$0xf]
    %v91 = vld [vmem:[%s1 + $0xac] sm:$0xf]
    %v92 = vld [vmem:[%s1 + $0xb0] sm:$0xf]
    %v93 = vld [vmem:[%s1 + $0xb4] sm:$0xf]
    %v94 = vld [vmem:[%s1 + $0xb8] sm:$0xf]
    %v95 = vld [vmem:[%s1 + $0xbc] sm:$0xf]
    %v96 = vld [vmem:[%s1 + $0xc0] sm:$0xf]
    %v97 = vld [vmem:[%s1 + $0xc4] sm:$0xf]
    %v98 = vld [vmem:[%s1 + $0xc8] sm:$0xf]
    %v99 = vld [vmem:[%s1 + $0xcc] sm:$0xf]
    %v100 = vld [vmem:[%s1 + $0xd0] sm:$0xf]
    %v101 = vld [vmem:[%s1 + $0xd4] sm:$0xf]
    %v102 = vld [vmem:[%s1 + $0xd8] sm:$0xf]
    %v103 = vld [vmem:[%s1 + $0xdc] sm:$0xf]
    %v104 = vld [vmem:[%s1 + $0xe0] sm:$0xf]
    %v105 = vld [vmem:[%s1 + $0xe4] sm:$0xf]
    %v106 = vld [vmem:[%s1 + $0xe8] sm:$0xf]
    %v107 = vld [vmem:[%s1 + $0xec] sm:$0xf]
    %v108 = vld [vmem:[%s1 + $0xf0] sm:$0xf]
    %v109 = vld [vmem:[%s1 + $0xf4] sm:$0xf]
    %v110 = vld [vmem:[%s1 + $0xf8] sm:$0xf]
    %v111 = vld [vmem:[%s1 + $0xfc] sm:$0xf]
    %v112 = vld [vmem:[%s2] sm:$0x1]
    %v114 = vlaneseq
    %v115 = vshrl.u32 %v114, 7
    %v116 = vsub.s32 0, %v115
    %v117 = vrot.slane %v112, %v116
    %v151 = vunpack.c.l.b16 %v16
    %v152 = vunpack.c.h.b16 %v16
    %v153 = vunpack.c.l.b16 %v17
    %v154 = vunpack.c.h.b16 %v17
    %v155 = vunpack.c.l.b16 %v18
    %v156 = vunpack.c.h.b16 %v18
    %v157 = vunpack.c.l.b16 %v19
    %v158 = vunpack.c.h.b16 %v19
    %v159 = vunpack.c.l.b16 %v20
    %v160 = vunpack.c.h.b16 %v20
    %v161 = vunpack.c.l.b16 %v21
    %v162 = vunpack.c.h.b16 %v21
    %v163 = vunpack.c.l.b16 %v22
    %v164 = vunpack.c.h.b16 %v22
    %v165 = vunpack.c.l.b16 %v23
    %v166 = vunpack.c.h.b16 %v23
    %v167 = vunpack.c.l.b16 %v24
    %v168 = vunpack.c.h.b16 %v24
    %v169 = vunpack.c.l.b16 %v25
    %v170 = vunpack.c.h.b16 %v25
    %v171 = vunpack.c.l.b16 %v26
    %v172 = vunpack.c.h.b16 %v26
    %v173 = vunpack.c.l.b16 %v27
    %v174 = vunpack.c.h.b16 %v27
    %v175 = vunpack.c.l.b16 %v28
    %v176 = vunpack.c.h.b16 %v28
    %v177 = vunpack.c.l.b16 %v29
    %v178 = vunpack.c.h.b16 %v29
    %v179 = vunpack.c.l.b16 %v30
    %v180 = vunpack.c.h.b16 %v30
    %v181 = vunpack.c.l.b16 %v31
    %v182 = vunpack.c.h.b16 %v31
    %v183 = vunpack.c.l.b16 %v32
    %v184 = vunpack.c.h.b16 %v32
    %v185 = vunpack.c.l.b16 %v33
    %v186 = vunpack.c.h.b16 %v33
    %v187 = vunpack.c.l.b16 %v34
    %v188 = vunpack.c.h.b16 %v34
    %v189 = vunpack.c.l.b16 %v35
    %v190 = vunpack.c.h.b16 %v35
    %v191 = vunpack.c.l.b16 %v36
    %v192 = vunpack.c.h.b16 %v36
    %v193 = vunpack.c.l.b16 %v37
    %v194 = vunpack.c.h.b16 %v37
    %v195 = vunpack.c.l.b16 %v38
    %v196 = vunpack.c.h.b16 %v38
    %v197 = vunpack.c.l.b16 %v39
    %v198 = vunpack.c.h.b16 %v39
    %v199 = vunpack.c.l.b16 %v40
    %v200 = vunpack.c.h.b16 %v40
    %v201 = vunpack.c.l.b16 %v41
    %v202 = vunpack.c.h.b16 %v41
    %v203 = vunpack.c.l.b16 %v42
    %v204 = vunpack.c.h.b16 %v42
    %v205 = vunpack.c.l.b16 %v43
    %v206 = vunpack.c.h.b16 %v43
    %v207 = vunpack.c.l.b16 %v44
    %v208 = vunpack.c.h.b16 %v44
    %v209 = vunpack.c.l.b16 %v45
    %v210 = vunpack.c.h.b16 %v45
    %v211 = vunpack.c.l.b16 %v46
    %v212 = vunpack.c.h.b16 %v46
    %v213 = vunpack.c.l.b16 %v47
    %v214 = vunpack.c.h.b16 %v47
    %v215 = vpack.c.b16 %v155, %v151
    %v216 = vpack.c.b16 %v156, %v152
    %v217 = vpack.c.b16 %v157, %v153
    %v218 = vpack.c.b16 %v158, %v154
    %v219 = vpack.c.b16 %v163, %v159
    %v220 = vpack.c.b16 %v164, %v160
    %v221 = vpack.c.b16 %v165, %v161
    %v222 = vpack.c.b16 %v166, %v162
    %v223 = vpack.c.b16 %v171, %v167
    %v224 = vpack.c.b16 %v172, %v168
    %v225 = vpack.c.b16 %v173, %v169
    %v226 = vpack.c.b16 %v174, %v170
    %v227 = vpack.c.b16 %v179, %v175
    %v228 = vpack.c.b16 %v180, %v176
    %v229 = vpack.c.b16 %v181, %v177
    %v230 = vpack.c.b16 %v182, %v178
    %v231 = vpack.c.b16 %v187, %v183
    %v232 = vpack.c.b16 %v188, %v184
    %v233 = vpack.c.b16 %v189, %v185
    %v234 = vpack.c.b16 %v190, %v186
    %v235 = vpack.c.b16 %v195, %v191
    %v236 = vpack.c.b16 %v196, %v192
    %v237 = vpack.c.b16 %v197, %v193
    %v238 = vpack.c.b16 %v198, %v194
    %v239 = vpack.c.b16 %v203, %v199
    %v240 = vpack.c.b16 %v204, %v200
    %v241 = vpack.c.b16 %v205, %v201
    %v242 = vpack.c.b16 %v206, %v202
    %v243 = vpack.c.b16 %v211, %v207
    %v244 = vpack.c.b16 %v212, %v208
    %v245 = vpack.c.b16 %v213, %v209
    %v246 = vpack.c.b16 %v214, %v210
    %v343 = vunpack.c.l.b16 %v48
    %v344 = vunpack.c.l.b16 %v49
    %v345 = vunpack.c.l.b16 %v50
    %v346 = vunpack.c.l.b16 %v51
    %v347 = vunpack.c.l.b16 %v52
    %v348 = vunpack.c.l.b16 %v53
    %v349 = vunpack.c.l.b16 %v54
    %v350 = vunpack.c.l.b16 %v55
    %v351 = vunpack.c.l.b16 %v56
    %v352 = vunpack.c.l.b16 %v57
    %v353 = vunpack.c.l.b16 %v58
    %v354 = vunpack.c.l.b16 %v59
    %v355 = vunpack.c.l.b16 %v60
    %v356 = vunpack.c.l.b16 %v61
    %v357 = vunpack.c.l.b16 %v62
    %v358 = vunpack.c.l.b16 %v63
    %v359 = vunpack.c.l.b16 %v64
    %v360 = vunpack.c.l.b16 %v65
    %v361 = vunpack.c.l.b16 %v66
    %v362 = vunpack.c.l.b16 %v67
    %v363 = vunpack.c.l.b16 %v68
    %v364 = vunpack.c.l.b16 %v69
    %v365 = vunpack.c.l.b16 %v70
    %v366 = vunpack.c.l.b16 %v71
    %v367 = vunpack.c.l.b16 %v72
    %v368 = vunpack.c.l.b16 %v73
    %v369 = vunpack.c.l.b16 %v74
    %v370 = vunpack.c.l.b16 %v75
    %v371 = vunpack.c.l.b16 %v76
    %v372 = vunpack.c.l.b16 %v77
    %v373 = vunpack.c.l.b16 %v78
    %v374 = vunpack.c.l.b16 %v79
    %v375 = vunpack.c.l.b16 %v80
    %v376 = vunpack.c.l.b16 %v81
    %v377 = vunpack.c.l.b16 %v82
    %v378 = vunpack.c.l.b16 %v83
    %v379 = vunpack.c.l.b16 %v84
    %v380 = vunpack.c.l.b16 %v85
    %v381 = vunpack.c.l.b16 %v86
    %v382 = vunpack.c.l.b16 %v87
    %v383 = vunpack.c.l.b16 %v88
    %v384 = vunpack.c.l.b16 %v89
    %v385 = vunpack.c.l.b16 %v90
    %v386 = vunpack.c.l.b16 %v91
    %v387 = vunpack.c.l.b16 %v92
    %v388 = vunpack.c.l.b16 %v93
    %v389 = vunpack.c.l.b16 %v94
    %v390 = vunpack.c.l.b16 %v95
    %v391 = vunpack.c.l.b16 %v96
    %v392 = vunpack.c.l.b16 %v97
    %v393 = vunpack.c.l.b16 %v98
    %v394 = vunpack.c.l.b16 %v99
    %v395 = vunpack.c.l.b16 %v100
    %v396 = vunpack.c.l.b16 %v101
    %v397 = vunpack.c.l.b16 %v102
    %v398 = vunpack.c.l.b16 %v103
    %v399 = vunpack.c.l.b16 %v104
    %v400 = vunpack.c.l.b16 %v105
    %v401 = vunpack.c.l.b16 %v106
    %v402 = vunpack.c.l.b16 %v107
    %v403 = vunpack.c.l.b16 %v108
    %v404 = vunpack.c.l.b16 %v109
    %v405 = vunpack.c.l.b16 %v110
    %v406 = vunpack.c.l.b16 %v111
    %v407 = vpack.c.b16 %v344, %v343
    %v408 = vpack.c.b16 %v346, %v345
    %v409 = vpack.c.b16 %v348, %v347
    %v410 = vpack.c.b16 %v350, %v349
    %v411 = vpack.c.b16 %v352, %v351
    %v412 = vpack.c.b16 %v354, %v353
    %v413 = vpack.c.b16 %v356, %v355
    %v414 = vpack.c.b16 %v358, %v357
    %v415 = vpack.c.b16 %v360, %v359
    %v416 = vpack.c.b16 %v362, %v361
    %v417 = vpack.c.b16 %v364, %v363
    %v418 = vpack.c.b16 %v366, %v365
    %v419 = vpack.c.b16 %v368, %v367
    %v420 = vpack.c.b16 %v370, %v369
    %v421 = vpack.c.b16 %v372, %v371
    %v422 = vpack.c.b16 %v374, %v373
    %v423 = vpack.c.b16 %v376, %v375
    %v424 = vpack.c.b16 %v378, %v377
    %v425 = vpack.c.b16 %v380, %v379
    %v426 = vpack.c.b16 %v382, %v381
    %v427 = vpack.c.b16 %v384, %v383
    %v428 = vpack.c.b16 %v386, %v385
    %v429 = vpack.c.b16 %v388, %v387
    %v430 = vpack.c.b16 %v390, %v389
    %v431 = vpack.c.b16 %v392, %v391
    %v432 = vpack.c.b16 %v394, %v393
    %v433 = vpack.c.b16 %v396, %v395
    %v434 = vpack.c.b16 %v398, %v397
    %v435 = vpack.c.b16 %v400, %v399
    %v436 = vpack.c.b16 %v402, %v401
    %v437 = vpack.c.b16 %v404, %v403
    %v438 = vpack.c.b16 %v406, %v405
    %471 = vmatprep.subr.bf16.mxu0 0
    %472 = vmatpush1.bf16.msra.mxu0 %v407
    %473 = vmatprep.subr.bf16.mxu0 0
    %474 = vmatpush1.bf16.msra.mxu0 %v408
    %475 = vmatprep.subr.bf16.mxu0 0
    %476 = vmatpush1.bf16.msra.mxu0 %v409
    %477 = vmatprep.subr.bf16.mxu0 0
    %478 = vmatpush1.bf16.msra.mxu0 %v410
    %479 = vmatprep.subr.bf16.mxu0 0
    %480 = vmatpush1.bf16.msra.mxu0 %v411
    %481 = vmatprep.subr.bf16.mxu0 0
    %482 = vmatpush1.bf16.msra.mxu0 %v412
    %483 = vmatprep.subr.bf16.mxu0 0
    %484 = vmatpush1.bf16.msra.mxu0 %v413
    %485 = vmatprep.subr.bf16.mxu0 0
    %486 = vmatpush1.bf16.msra.mxu0 %v414
    %487 = vmatprep.subr.bf16.mxu0 0
    %488 = vmatpush1.bf16.msra.mxu0 %v415
    %489 = vmatprep.subr.bf16.mxu0 0
    %490 = vmatpush1.bf16.msra.mxu0 %v416
    %491 = vmatprep.subr.bf16.mxu0 0
    %492 = vmatpush1.bf16.msra.mxu0 %v417
    %493 = vmatprep.subr.bf16.mxu0 0
    %494 = vmatpush1.bf16.msra.mxu0 %v418
    %495 = vmatprep.subr.bf16.mxu0 0
    %496 = vmatpush1.bf16.msra.mxu0 %v419
    %497 = vmatprep.subr.bf16.mxu0 0
    %498 = vmatpush1.bf16.msra.mxu0 %v420
    %499 = vmatprep.subr.bf16.mxu0 0
    %500 = vmatpush1.bf16.msra.mxu0 %v421
    %501 = vmatprep.subr.bf16.mxu0 0
    %502 = vmatpush1.bf16.msra.mxu0 %v422
    %503 = vmatprep.mubr.bf16.mxu0 %v216
    %504 = vmatmul.mubr.bf16.gmra.mrb[0].mxu0 %v215
    %v505 = vpop.f32.mrb[0].mxu0
    %v506 = vadd.f32 %v117, %v505
    %v507 = vpop.f32.mrb[0].mxu0
    %v508 = vpop.f32.mrb[0].mxu0
    %v509 = vadd.f32 %v117, %v508
    %v510 = vpop.f32.mrb[0].mxu0
    %511 = vmatprep.mubr.bf16.mxu0 %v220
    %512 = vmatmul.mubr.bf16.gmra.mrb[0].mxu0 %v219
    %v513 = vpop.f32.mrb[0].mxu0
    %v514 = vadd.f32 %v117, %v513
    %v515 = vpop.f32.mrb[0].mxu0
    %v516 = vpop.f32.mrb[0].mxu0
    %v517 = vadd.f32 %v117, %v516
    %v518 = vpop.f32.mrb[0].mxu0
    %519 = vmatprep.mubr.bf16.mxu0 %v224
    %520 = vmatmul.mubr.bf16.gmra.mrb[0].mxu0 %v223
    %v521 = vpop.f32.mrb[0].mxu0
    %v522 = vadd.f32 %v117, %v521
    %v523 = vpop.f32.mrb[0].mxu0
    %v524 = vpop.f32.mrb[0].mxu0
    %v525 = vadd.f32 %v117, %v524
    %v526 = vpop.f32.mrb[0].mxu0
    %527 = vmatprep.mubr.bf16.mxu0 %v228
    %528 = vmatmul.mubr.bf16.gmra.mrb[0].mxu0 %v227
    %v529 = vpop.f32.mrb[0].mxu0
    %v530 = vadd.f32 %v117, %v529
    %v531 = vpop.f32.mrb[0].mxu0
    %v532 = vpop.f32.mrb[0].mxu0
    %v533 = vadd.f32 %v117, %v532
    %v534 = vpop.f32.mrb[0].mxu0
    %535 = vmatprep.mubr.bf16.mxu0 %v232
    %536 = vmatmul.mubr.bf16.gmra.mrb[0].mxu0 %v231
    %v537 = vpop.f32.mrb[0].mxu0
    %v538 = vadd.f32 %v117, %v537
    %v539 = vpop.f32.mrb[0].mxu0
    %v540 = vpop.f32.mrb[0].mxu0
    %v541 = vadd.f32 %v117, %v540
    %v542 = vpop.f32.mrb[0].mxu0
    %543 = vmatprep.mubr.bf16.mxu0 %v236
    %544 = vmatmul.mubr.bf16.gmra.mrb[0].mxu0 %v235
    %v545 = vpop.f32.mrb[0].mxu0
    %v546 = vadd.f32 %v117, %v545
    %v547 = vpop.f32.mrb[0].mxu0
    %v548 = vpop.f32.mrb[0].mxu0
    %v549 = vadd.f32 %v117, %v548
    %v550 = vpop.f32.mrb[0].mxu0
    %551 = vmatprep.mubr.bf16.mxu0 %v240
    %552 = vmatmul.mubr.bf16.gmra.mrb[0].mxu0 %v239
    %v553 = vpop.f32.mrb[0].mxu0
    %v554 = vadd.f32 %v117, %v553
    %v555 = vpop.f32.mrb[0].mxu0
    %v556 = vpop.f32.mrb[0].mxu0
    %v557 = vadd.f32 %v117, %v556
    %v558 = vpop.f32.mrb[0].mxu0
    %559 = vmatprep.mubr.bf16.mxu0 %v244
    %560 = vmatmul.mubr.bf16.gmra.mrb[0].mxu0 %v243
    %v561 = vpop.f32.mrb[0].mxu0
    %v562 = vadd.f32 %v117, %v561
    %v563 = vpop.f32.mrb[0].mxu0
    %v564 = vpop.f32.mrb[0].mxu0
    %v565 = vadd.f32 %v117, %v564
    %v566 = vpop.f32.mrb[0].mxu0
    %567 = vdwg.mxu0
    %568 = vmatprep.subr.bf16.mxu0 0
    %569 = vmatpush1.bf16.msra.mxu0 %v423
    %570 = vmatprep.subr.bf16.mxu0 0
    %571 = vmatpush1.bf16.msra.mxu0 %v424
    %572 = vmatprep.subr.bf16.mxu0 0
    %573 = vmatpush1.bf16.msra.mxu0 %v425
    %574 = vmatprep.subr.bf16.mxu0 0
    %575 = vmatpush1.bf16.msra.mxu0 %v426
    %576 = vmatprep.subr.bf16.mxu0 0
    %577 = vmatpush1.bf16.msra.mxu0 %v427
    %578 = vmatprep.subr.bf16.mxu0 0
    %579 = vmatpush1.bf16.msra.mxu0 %v428
    %580 = vmatprep.subr.bf16.mxu0 0
    %581 = vmatpush1.bf16.msra.mxu0 %v429
    %582 = vmatprep.subr.bf16.mxu0 0
    %583 = vmatpush1.bf16.msra.mxu0 %v430
    %584 = vmatprep.subr.bf16.mxu0 0
    %585 = vmatpush1.bf16.msra.mxu0 %v431
    %586 = vmatprep.subr.bf16.mxu0 0
    %587 = vmatpush1.bf16.msra.mxu0 %v432
    %588 = vmatprep.subr.bf16.mxu0 0
    %589 = vmatpush1.bf16.msra.mxu0 %v433
    %590 = vmatprep.subr.bf16.mxu0 0
    %591 = vmatpush1.bf16.msra.mxu0 %v434
    %592 = vmatprep.subr.bf16.mxu0 0
    %593 = vmatpush1.bf16.msra.mxu0 %v435
    %594 = vmatprep.subr.bf16.mxu0 0
    %595 = vmatpush1.bf16.msra.mxu0 %v436
    %596 = vmatprep.subr.bf16.mxu0 0
    %597 = vmatpush1.bf16.msra.mxu0 %v437
    %598 = vmatprep.subr.bf16.mxu0 0
    %599 = vmatpush1.bf16.msra.mxu0 %v438
    %600 = vmatprep.mubr.bf16.mxu0 %v218
    %601 = vmatmul.mubr.bf16.gmra.mrb[0].mxu0 %v217
    %v602 = vpop.f32.mrb[0].mxu0
    %v603 = vadd.f32 %v506, %v602
    %v604 = vpop.f32.mrb[0].mxu0
    %v605 = vpop.f32.mrb[0].mxu0
    %v606 = vadd.f32 %v509, %v605
    %v607 = vpop.f32.mrb[0].mxu0
    %608 = vmatprep.mubr.bf16.mxu0 %v222
    %609 = vmatmul.mubr.bf16.gmra.mrb[0].mxu0 %v221
    %v610 = vpop.f32.mrb[0].mxu0
    %v611 = vadd.f32 %v514, %v610
    %v612 = vpop.f32.mrb[0].mxu0
    %v613 = vpop.f32.mrb[0].mxu0
    %v614 = vadd.f32 %v517, %v613
    %v615 = vpop.f32.mrb[0].mxu0
    %616 = vmatprep.mubr.bf16.mxu0 %v226
    %617 = vmatmul.mubr.bf16.gmra.mrb[0].mxu0 %v225
    %v618 = vpop.f32.mrb[0].mxu0
    %v619 = vadd.f32 %v522, %v618
    %v620 = vpop.f32.mrb[0].mxu0
    %v621 = vpop.f32.mrb[0].mxu0
    %v622 = vadd.f32 %v525, %v621
    %v623 = vpop.f32.mrb[0].mxu0
    %624 = vmatprep.mubr.bf16.mxu0 %v230
    %625 = vmatmul.mubr.bf16.gmra.mrb[0].mxu0 %v229
    %v626 = vpop.f32.mrb[0].mxu0
    %v627 = vadd.f32 %v530, %v626
    %v628 = vpop.f32.mrb[0].mxu0
    %v629 = vpop.f32.mrb[0].mxu0
    %v630 = vadd.f32 %v533, %v629
    %v631 = vpop.f32.mrb[0].mxu0
    %632 = vmatprep.mubr.bf16.mxu0 %v234
    %633 = vmatmul.mubr.bf16.gmra.mrb[0].mxu0 %v233
    %v634 = vpop.f32.mrb[0].mxu0
    %v635 = vadd.f32 %v538, %v634
    %v636 = vpop.f32.mrb[0].mxu0
    %v637 = vpop.f32.mrb[0].mxu0
    %v638 = vadd.f32 %v541, %v637
    %v639 = vpop.f32.mrb[0].mxu0
    %640 = vmatprep.mubr.bf16.mxu0 %v238
    %641 = vmatmul.mubr.bf16.gmra.mrb[0].mxu0 %v237
    %v642 = vpop.f32.mrb[0].mxu0
    %v643 = vadd.f32 %v546, %v642
    %v644 = vpop.f32.mrb[0].mxu0
    %v645 = vpop.f32.mrb[0].mxu0
    %v646 = vadd.f32 %v549, %v645
    %v647 = vpop.f32.mrb[0].mxu0
    %648 = vmatprep.mubr.bf16.mxu0 %v242
    %649 = vmatmul.mubr.bf16.gmra.mrb[0].mxu0 %v241
    %v650 = vpop.f32.mrb[0].mxu0
    %v651 = vadd.f32 %v554, %v650
    %v652 = vpop.f32.mrb[0].mxu0
    %v653 = vpop.f32.mrb[0].mxu0
    %v654 = vadd.f32 %v557, %v653
    %v655 = vpop.f32.mrb[0].mxu0
    %656 = vmatprep.mubr.bf16.mxu0 %v246
    %657 = vmatmul.mubr.bf16.gmra.mrb[0].mxu0 %v245
    %v658 = vpop.f32.mrb[0].mxu0
    %v659 = vadd.f32 %v562, %v658
    %v660 = vpop.f32.mrb[0].mxu0
    %v661 = vpop.f32.mrb[0].mxu0
    %v662 = vadd.f32 %v565, %v661
    %v663 = vpop.f32.mrb[0].mxu0
    %664 = vdwg.mxu0
    %vm665 = vcmask 261120
    %666 = vst.msk [vmem:[#allocation2] sm:$0xff] %vm665, %v603
    %667 = vst.msk [vmem:[#allocation2 + $0x8] sm:$0xff] %vm665, %v606
    %668 = vst.msk [vmem:[#allocation2 + $0x10] sm:$0xff] %vm665, %v611
    %669 = vst.msk [vmem:[#allocation2 + $0x18] sm:$0xff] %vm665, %v614
    %670 = vst.msk [vmem:[#allocation2 + $0x20] sm:$0xff] %vm665, %v619
    %671 = vst.msk [vmem:[#allocation2 + $0x28] sm:$0xff] %vm665, %v622
    %672 = vst.msk [vmem:[#allocation2 + $0x30] sm:$0xff] %vm665, %v627
    %673 = vst.msk [vmem:[#allocation2 + $0x38] sm:$0xff] %vm665, %v630
    %674 = vst.msk [vmem:[#allocation2 + $0x40] sm:$0xff] %vm665, %v635
    %675 = vst.msk [vmem:[#allocation2 + $0x48] sm:$0xff] %vm665, %v638
    %676 = vst.msk [vmem:[#allocation2 + $0x50] sm:$0xff] %vm665, %v643
    %677 = vst.msk [vmem:[#allocation2 + $0x58] sm:$0xff] %vm665, %v646
    %678 = vst.msk [vmem:[#allocation2 + $0x60] sm:$0xff] %vm665, %v651
    %679 = vst.msk [vmem:[#allocation2 + $0x68] sm:$0xff] %vm665, %v654
    %680 = vst.msk [vmem:[#allocation2 + $0x70] sm:$0xff] %vm665, %v659
    %681 = vst.msk [vmem:[#allocation2 + $0x78] sm:$0xff] %vm665, %v662
    // Predicated region
    $region14: #{tpu_custom_call.1} parent=1 // pred_check
      _
    $region15: #{tpu_custom_call.1} parent=1 // pred_check_branch
      %683 = sbr.rel (0) target = $region17
    $region16: #{tpu_custom_call.1} parent=1 // pred_region
      %s685 = ssub.s32 2048, 256
      %686 = vsyncadd [#allocation3], %s685
      %s687 = sshll.u32 [#allocation2], 4
      %s688 = int_to_ptr.vmem [resolvable:$true] %s687
      %693 = dma.vmem_to_hbm [thread:$0]  %s688, 256, %s3, [#allocation3], 128, 128, 8
    $region17: #{tpu_custom_call.1} parent=1 // pred_fallthru
      _
    // Predicated region
    $region18: #{tpu_custom_call.1} parent=1 // pred_check
      _
    $region19: #{tpu_custom_call.1} parent=1 // pred_check_branch
      %695 = sbr.rel (0) target = $region21
    $region20: #{tpu_custom_call.1} parent=1 // pred_region
      %696 = dma.done [#allocation3], 2048
    $region21: #{tpu_custom_call.1} parent=1 // pred_fallthru
      _
    %697 = vsyncpa [#allocation3], 1

</llo_original>
